<compile_context>
chip_gen: v5e
topology: v5e:2x2
jax: 0.10.0
libtpu: 0.0.40
codegen_flags: <defaults>
</compile_context>

<pallas_src>
import jax
import jax.numpy as jnp
from jax.experimental import pallas as pl
from jax.experimental.pallas import tpu as pltpu


def _ae_fused_kernel(x_ref, w_ref, b_ref, o_ref):
    # x: (TB, L)   w: (L, L)   b: (1, L)   o: (TB, L)
    # Single fused matmul: out = x @ W + b, where W is the folded encoder∘decoder
    # weight (block-diagonal when the batch is lane-packed).
    acc = jnp.dot(x_ref[...], w_ref[...], preferred_element_type=jnp.float32)
    o_ref[...] = (acc + b_ref[...].astype(jnp.float32)).astype(o_ref.dtype)


def _reference_forward(x, w1, b1, w2, b2):
    latent = x @ w1.T + b1
    return latent @ w2.T + b2


def _vmem_limit_bytes():
    # Generation-aware scoped-VMEM limit: ~75% of physical capacity, capped at 96 MiB.
    # v7x (64 MiB) -> ~48 MiB; v5e/v6e (128 MiB) -> 96 MiB.
    try:
        cap = int(pltpu.get_tpu_info().vmem_capacity_bytes)
    except Exception:
        cap = 64 << 20
    return min(int(0.75 * cap), 96 << 20)


def simple_ae_forward(x, w1, b1, w2, b2, *, block_rows=8192,
                      min_rows_for_kernel=2048, force_kernel=False):
    """Forward pass of SimpleAE.

    x:  (B, indim)
    w1: (latent, indim), b1: (latent,)   -- PyTorch nn.Linear layout
    w2: (indim, latent), b2: (indim,)
    """
    B, indim = x.shape
    latent_dim = w1.shape[0]
    assert w1.shape == (latent_dim, indim)
    assert w2.shape == (indim, latent_dim)

    # Tiny batches: the kernel is pure launch/step overhead; let XLA fuse it.
    if B < min_rows_for_kernel and not force_kernel:
        return _reference_forward(x, w1, b1, w2, b2)

    # --- fold the two bias-linear layers (no nonlinearity between them) -------
    #   out = (x @ w1^T + b1) @ w2^T + b2 = x @ (w2 @ w1)^T + (w2 @ b1 + b2)
    w_eff = w2 @ w1                      # (indim, indim)
    b_eff = w2 @ b1 + b2                 # (indim,)

    # --- lane-dense packing ----------------------------------------------------
    # View the contiguous (B, indim) batch as (B//pack, pack*indim) so every DMA /
    # store is a full 128-lane slab (unmasked vst); the weight becomes a
    # block-diagonal (pack*indim)^2 matrix so the single matmul still applies
    # W_eff to each original row independently.
    pack = 1
    if indim < 128 and 128 % indim == 0 and B % (128 // indim) == 0:
        pack = 128 // indim
    L = pack * indim
    if pack > 1:
        w_k = jnp.kron(jnp.eye(pack, dtype=w_eff.dtype), w_eff.T)   # (L, L) block-diag
        b_k = jnp.tile(b_eff, pack).reshape(1, L)
        x_k = x.reshape(B // pack, L)
    else:
        w_k = w_eff.T
        b_k = b_eff.reshape(1, L)
        x_k = x
    rows = x_k.shape[0]

    # --- tile-size selection (generation-aware) --------------------------------
    itemsize = jnp.dtype(x.dtype).itemsize
    vmem_limit = _vmem_limit_bytes()
    # Resident folded weight + bias, double-buffered by the pipeline.
    weight_bytes = (w_k.size + b_k.size) * jnp.dtype(w_k.dtype).itemsize * 2
    # Per-row VMEM cost: x + out tiles double-buffered (4 rows) + f32 accumulator (1 row).
    per_row = 4 * L * itemsize + L * 4
    avail = max(vmem_limit - weight_bytes - (4 << 20), per_row * 8)
    max_tb = max(8, (avail // per_row) // 8 * 8)

    tb = min(rows, block_rows, max_tb)
    if rows > 8:
        tb = max(8, (tb // 8) * 8)
    # Keep >= 2 grid steps when possible so the "parallel" batch axis can shard
    # across both TensorCores on v7x (and the pipeline actually overlaps).
    if rows >= 16 and pl.cdiv(rows, tb) < 2:
        tb = max(8, ((rows // 2) // 8) * 8)
    grid = (pl.cdiv(rows, tb),)

    # VMEM budget: in/out tiles double-buffered + f32 acc temp + resident weights + headroom.
    tile_bytes = tb * L * itemsize
    vmem_budget = 4 * tile_bytes + tb * L * 4 + weight_bytes + (2 << 20)
    vmem_budget = int(min(max(vmem_budget, 8 << 20), vmem_limit))

    const = lambda i: (0, 0)
    out_packed = pl.pallas_call(
        _ae_fused_kernel,
        out_shape=jax.ShapeDtypeStruct((rows, L), x.dtype),
        grid=grid,
        in_specs=[
            pl.BlockSpec((tb, L), lambda i: (i, 0)),   # x: batch-tiled, lane-dense
            pl.BlockSpec((L, L), const),               # folded weight: VMEM-resident
            pl.BlockSpec((1, L), const),               # folded bias: VMEM-resident
        ],
        out_specs=pl.BlockSpec((tb, L), lambda i: (i, 0)),   # out: batch-tiled
        compiler_params=pltpu.CompilerParams(
            dimension_semantics=("parallel",),   # megacore on v7x; harmless elsewhere
            vmem_limit_bytes=vmem_budget,
        ),
    )(x_k, w_k, b_k)
    return out_packed.reshape(B, indim)


if __name__ == "__main__":
    # Small shapes consistent with the module: indim=64, latent_dim=16.
    indim, latent_dim = 64, 16

    key = jax.random.PRNGKey(0)
    kx, kw1, kb1, kw2, kb2, kx2, kx3 = jax.random.split(key, 7)

    # PyTorch nn.Linear-style init: uniform(-1/sqrt(fan_in), 1/sqrt(fan_in)).
    bound1 = 1.0 / jnp.sqrt(jnp.float32(indim))
    bound2 = 1.0 / jnp.sqrt(jnp.float32(latent_dim))
    w1 = jax.random.uniform(kw1, (latent_dim, indim), jnp.float32, -bound1, bound1)
    b1 = jax.random.uniform(kb1, (latent_dim,), jnp.float32, -bound1, bound1)
    w2 = jax.random.uniform(kw2, (indim, latent_dim), jnp.float32, -bound2, bound2)
    b2 = jax.random.uniform(kb2, (indim,), jnp.float32, -bound2, bound2)

    # Case 1: tiny batch, single tile, lane-packed (rows=4, L=128) — force kernel path.
    B1 = 8
    x1 = jax.random.normal(kx, (B1, indim), jnp.float32)
    out1 = jax.block_until_ready(
        simple_ae_forward(x1, w1, b1, w2, b2, force_kernel=True))
    ref1 = _reference_forward(x1, w1, b1, w2, b2)
    assert out1.shape == (B1, indim)
    assert jnp.allclose(out1, ref1, atol=1e-5, rtol=1e-5)

    # Case 2: multi-step grid (rows=128 packed, tb=64 -> 2 pipelined/parallel steps).
    B2 = 256
    x2 = jax.random.normal(kx2, (B2, indim), jnp.float32)
    out2 = jax.block_until_ready(
        simple_ae_forward(x2, w1, b1, w2, b2, block_rows=64, force_kernel=True))
    ref2 = _reference_forward(x2, w1, b1, w2, b2)
    assert out2.shape == (B2, indim)
    assert jnp.allclose(out2, ref2, atol=1e-5, rtol=1e-5)

    # Case 3: odd batch -> unpacked fallback (lane width = indim, partial last tile).
    B3 = 9
    x3 = jax.random.normal(kx3, (B3, indim), jnp.float32)
    out3 = jax.block_until_ready(
        simple_ae_forward(x3, w1, b1, w2, b2, force_kernel=True))
    ref3 = _reference_forward(x3, w1, b1, w2, b2)
    assert out3.shape == (B3, indim)
    assert jnp.allclose(out3, ref3, atol=1e-5, rtol=1e-5)

    print("KERNEL_OK")
</pallas_src>

<mosaic_0001>
module attributes {stable_mosaic.version = 11 : i64} {
  func.func @_ae_fused_kernel(%arg0: i32, %arg1: memref<4x128xf32, #tpu.memory_space<vmem>>, %arg2: memref<128x128xf32, #tpu.memory_space<vmem>>, %arg3: memref<1x128xf32, #tpu.memory_space<vmem>>, %arg4: memref<4x128xf32, #tpu.memory_space<vmem>>) attributes {dimension_semantics = [#tpu.dimension_semantics<parallel>], iteration_bounds = array<i64: 1>, scalar_prefetch = 0 : i64, scratch_operands = 0 : i64, tpu.core_type = #tpu.core_type<tc>, window_params = [{transform_indices = @transform_0, window_bounds = array<i64: 4, 128>}, {pipeline_mode = #tpu.pipeline_mode<synchronous>, transform_indices = @transform_1, window_bounds = array<i64: 128, 128>}, {pipeline_mode = #tpu.pipeline_mode<synchronous>, transform_indices = @transform_2, window_bounds = array<i64: 1, 128>}, {transform_indices = @transform_3, window_bounds = array<i64: 4, 128>}]} {
    %c0 = arith.constant 0 : index
    %c0_0 = arith.constant 0 : index
    %0 = vector.load %arg1[%c0, %c0_0] : memref<4x128xf32, #tpu.memory_space<vmem>>, vector<4x128xf32>
    %c0_1 = arith.constant 0 : index
    %c0_2 = arith.constant 0 : index
    %1 = vector.load %arg2[%c0_1, %c0_2] : memref<128x128xf32, #tpu.memory_space<vmem>>, vector<128x128xf32>
    %cst = arith.constant dense<0.000000e+00> : vector<4x128xf32>
    %2 = tpu.matmul %0, %1, %cst {dimension_numbers = #tpu.dot_dimension_numbers<[1], [0], [0], [1], [0, 0, 1, 1], [], []>} : vector<4x128xf32>, vector<128x128xf32>, vector<4x128xf32> -> vector<4x128xf32>
    %c0_3 = arith.constant 0 : index
    %c0_4 = arith.constant 0 : index
    %3 = vector.load %arg3[%c0_3, %c0_4] : memref<1x128xf32, #tpu.memory_space<vmem>>, vector<1x128xf32>
    %4 = vector.broadcast %3 : vector<1x128xf32> to vector<4x128xf32>
    %5 = arith.addf %2, %4 : vector<4x128xf32>
    %c0_5 = arith.constant 0 : index
    %c0_6 = arith.constant 0 : index
    %6 = vector.load %arg4[%c0_5, %c0_6] : memref<4x128xf32, #tpu.memory_space<vmem>>, vector<4x128xf32>
    tpu.vector_store %arg4[%c0_5, %c0_6], %5 {strides = array<i32>} : memref<4x128xf32, #tpu.memory_space<vmem>>, vector<4x128xf32>,
    return
  }
  func.func @transform_0(%arg0: i32) -> (i32, i32) {
    %c0_i32 = arith.constant 0 : i32
    %c0_i32_0 = arith.constant 0 : i32
    return %arg0, %c0_i32 : i32, i32
  }
  func.func @transform_1(%arg0: i32) -> (i32, i32) {
    %c0_i32 = arith.constant 0 : i32
    %c0_i32_0 = arith.constant 0 : i32
    %c0_i32_1 = arith.constant 0 : i32
    return %c0_i32, %c0_i32_0 : i32, i32
  }
  func.func @transform_2(%arg0: i32) -> (i32, i32) {
    %c0_i32 = arith.constant 0 : i32
    %c0_i32_0 = arith.constant 0 : i32
    %c0_i32_1 = arith.constant 0 : i32
    return %c0_i32, %c0_i32_0 : i32, i32
  }
  func.func @transform_3(%arg0: i32) -> (i32, i32) {
    %c0_i32 = arith.constant 0 : i32
    %c0_i32_0 = arith.constant 0 : i32
    return %arg0, %c0_i32 : i32, i32
  }
}

</mosaic_0001>

<llo_original>
// kernel: tpu_custom_call.1
$region0: #{tpu_custom_call.1}
  #allocation0 [shape = 'u32[]', space=smem, size = 0x4, offset = 0x4, fixed_abs, tag = 'smem constant byte address 0x4 - core index']
  #allocation1 [shape = 'u32[72,128]{1,0:T(1,128)}', space=vmem, size = 0x9000, scoped, tag = 'internal scratch']
  %s0 = inlined_call_operand.hbm [shape: f32[4,128], index: 0, kind: input, shape index: {}]
  %s1 = inlined_call_operand.hbm [shape: f32[128,128], index: 1, kind: input, shape index: {}]
  %s2 = inlined_call_operand.vmem [shape: f32[1,128], index: 2, kind: input, shape index: {}]
  %s3 = inlined_call_operand.hbm [shape: f32[4,128], index: 3, kind: output, shape index: {}]
  %s4 = sld [smem:[#allocation0]]
  $region30: #{tpu_custom_call.1} parent=0
    _
  %s6 = ssub.s32 1, %s4
  %s7 = scalar_select 0, %s6, %s4
  $region1: #{tpu_custom_call.1} parent=0
    #allocation2 [shape = 'u8[2048]{0}', space=vmem, size = 0x800, scoped, tag = 'input window, operand 0, single buffered']
    #allocation3 [shape = 's32[1]{0}', space=sflag, size = 0x4, scoped, tag = 'scoped memory for tpu_custom_call.1']
    #allocation4 [shape = 's32[1]{0}', space=sflag, size = 0x4, scoped, tag = 'scoped memory for tpu_custom_call.1']
    #allocation5 [shape = 'u8[65536]{0}', space=vmem, size = 0x10000, scoped, tag = 'input window, operand 1, single buffered']
    #allocation6 [shape = 's32[1]{0}', space=sflag, size = 0x4, scoped, tag = 'scoped memory for tpu_custom_call.1']
    #allocation7 [shape = 'u8[2048]{0}', space=vmem, size = 0x800, scoped, tag = 'output window, operand 0, single buffered']
    %8 = vsyncpa [#allocation3], 0
    %9 = vsyncpa [#allocation6], 0
    %10 = vsyncpa [#allocation4], 0
    // Predicated region
    $region2: #{tpu_custom_call.1} parent=1 // pred_check
      _
    $region3: #{tpu_custom_call.1} parent=1 // pred_check_branch
      %12 = sbr.rel (0) target = $region5
    $region4: #{tpu_custom_call.1} parent=1 // pred_region
      %14 = vsyncadd [#allocation3], 0
      %s16 = sshll.u32 %s0, 4
      %s17 = int_to_ptr.hbm [resolvable:$true] %s16
      %s18 = sshll.u32 [#allocation2], 4
      %s19 = int_to_ptr.vmem [resolvable:$true] %s18
      %21 = dma.hbm_to_vmem [thread:$0]  %s17, 64, %s19, [#allocation3]
    $region5: #{tpu_custom_call.1} parent=1 // pred_fallthru
      _
    // Predicated region
    $region6: #{tpu_custom_call.1} parent=1 // pred_check
      _
    $region7: #{tpu_custom_call.1} parent=1 // pred_check_branch
      %23 = sbr.rel (0) target = $region9
    $region8: #{tpu_custom_call.1} parent=1 // pred_region
      %25 = vsyncadd [#allocation6], 0
      %s26 = sshll.u32 %s1, 4
      %s27 = int_to_ptr.hbm [resolvable:$true] %s26
      %s28 = sshll.u32 [#allocation5], 4
      %s29 = int_to_ptr.vmem [resolvable:$true] %s28
      %34 = dma.hbm_to_vmem [thread:$0]  %s27, 2048, %s29, [#allocation6], 128, 128, 8
    $region9: #{tpu_custom_call.1} parent=1 // pred_fallthru
      _
    // Predicated region
    $region10: #{tpu_custom_call.1} parent=1 // pred_check
      _
    $region11: #{tpu_custom_call.1} parent=1 // pred_check_branch
      %36 = sbr.rel (0) target = $region13
    $region12: #{tpu_custom_call.1} parent=1 // pred_region
      _
    $region13: #{tpu_custom_call.1} parent=1 // pred_fallthru
      _
    // Predicated region
    $region14: #{tpu_custom_call.1} parent=1 // pred_check
      _
    $region15: #{tpu_custom_call.1} parent=1 // pred_check_branch
      %38 = sbr.rel (0) target = $region17
    $region16: #{tpu_custom_call.1} parent=1 // pred_region
      %40 = dma.done [#allocation3], 64
    $region17: #{tpu_custom_call.1} parent=1 // pred_fallthru
      _
    // Predicated region
    $region18: #{tpu_custom_call.1} parent=1 // pred_check
      _
    $region19: #{tpu_custom_call.1} parent=1 // pred_check_branch
      %42 = sbr.rel (0) target = $region21
    $region20: #{tpu_custom_call.1} parent=1 // pred_region
      %44 = dma.done [#allocation6], 2048
    $region21: #{tpu_custom_call.1} parent=1 // pred_fallthru
      _
    %v45 = vld [vmem:[#allocation2] sm:$0xf]
    %v46 = vld [vmem:[#allocation5] sm:$0xff]
    %v47 = vld [vmem:[#allocation5 + $0x8] sm:$0xff]
    %v48 = vld [vmem:[#allocation5 + $0x10] sm:$0xff]
    %v49 = vld [vmem:[#allocation5 + $0x18] sm:$0xff]
    %v50 = vld [vmem:[#allocation5 + $0x20] sm:$0xff]
    %v51 = vld [vmem:[#allocation5 + $0x28] sm:$0xff]
    %v52 = vld [vmem:[#allocation5 + $0x30] sm:$0xff]
    %v53 = vld [vmem:[#allocation5 + $0x38] sm:$0xff]
    %v54 = vld [vmem:[#allocation5 + $0x40] sm:$0xff]
    %v55 = vld [vmem:[#allocation5 + $0x48] sm:$0xff]
    %v56 = vld [vmem:[#allocation5 + $0x50] sm:$0xff]
    %v57 = vld [vmem:[#allocation5 + $0x58] sm:$0xff]
    %v58 = vld [vmem:[#allocation5 + $0x60] sm:$0xff]
    %v59 = vld [vmem:[#allocation5 + $0x68] sm:$0xff]
    %v60 = vld [vmem:[#allocation5 + $0x70] sm:$0xff]
    %v61 = vld [vmem:[#allocation5 + $0x78] sm:$0xff]
    %v62 = vld [vmem:[%s2] sm:$0x1]
    %v64 = vperm.slane %v62, 0
    %66 = vmatpush.msra.mxu0 %v61
    %67 = vmatpush.msra.mxu0 %v60
    %68 = vmatpush.msra.mxu0 %v59
    %69 = vmatpush.msra.mxu0 %v58
    %70 = vmatpush.msra.mxu0 %v57
    %71 = vmatpush.msra.mxu0 %v56
    %72 = vmatpush.msra.mxu0 %v55
    %73 = vmatpush.msra.mxu0 %v54
    %74 = vmatpush.msra.mxu0 %v53
    %75 = vmatpush.msra.mxu0 %v52
    %76 = vmatpush.msra.mxu0 %v51
    %77 = vmatpush.msra.mxu0 %v50
    %78 = vmatpush.msra.mxu0 %v49
    %79 = vmatpush.msra.mxu0 %v48
    %80 = vmatpush.msra.mxu0 %v47
    %81 = vmatpush.msra.mxu0 %v46
    %82 = vmatmul.f32.gmra.mxu0 %v45
    %v83 = vpop.f32.mrf.mxu0
    %v84 = vadd.f32 %v64, %v83
    %85 = vdwg.mxu0
    %86 = vst [vmem:[#allocation7] sm:$0xf] %v84
    // Predicated region
    $region22: #{tpu_custom_call.1} parent=1 // pred_check
      _
    $region23: #{tpu_custom_call.1} parent=1 // pred_check_branch
      %88 = sbr.rel (0) target = $region25
    $region24: #{tpu_custom_call.1} parent=1 // pred_region
      %90 = vsyncadd [#allocation4], 0
      %s92 = sshll.u32 [#allocation7], 4
      %s93 = int_to_ptr.vmem [resolvable:$true] %s92
      %s94 = sshll.u32 %s3, 4
      %s95 = int_to_ptr.hbm [resolvable:$true] %s94
      %97 = dma.vmem_to_hbm [thread:$0]  %s93, 64, %s95, [#allocation4]
    $region25: #{tpu_custom_call.1} parent=1 // pred_fallthru
      _
    // Predicated region
    $region26: #{tpu_custom_call.1} parent=1 // pred_check
      _
    $region27: #{tpu_custom_call.1} parent=1 // pred_check_branch
      %99 = sbr.rel (0) target = $region29
    $region28: #{tpu_custom_call.1} parent=1 // pred_region
      %101 = dma.done [#allocation4], 64
    $region29: #{tpu_custom_call.1} parent=1 // pred_fallthru
      _
    %102 = vsyncpa [#allocation3], 1
    %103 = vsyncpa [#allocation6], 1
    %104 = vsyncpa [#allocation4], 1

</llo_original>
